<compile_context>
chip_gen: v5e
topology: v5e:2x2
jax: 0.10.0
libtpu: 0.0.40
codegen_flags: <defaults>
</compile_context>

<pallas_src>
import functools

import jax
import jax.numpy as jnp
import numpy as np
from jax import lax
from jax.experimental import pallas as pl
from jax.experimental.pallas import tpu as pltpu


def _sdpa_body(q_ref, k_ref, v_ref, mask_ref, *, temperature, mxu_dtype):
    """Shared compute for one (batch, Lq-tile) grid step."""
    q = q_ref[0]                                  # [tq, D]  (native dtype)
    k = k_ref[0]                                  # [Lk, D]
    v = v_ref[0]                                  # [Lk, Dv]
    m = mask_ref[0].astype(jnp.float32)           # [tq, Lk] stored narrow, widened here

    # (q @ k^T) on the MXU: bf16 operands when inputs are f32, f32 accumulation.
    # Contraction on k's last dim -> no in-kernel k transpose (no XLU/VMEM copy).
    logits = lax.dot_general(q.astype(mxu_dtype), k.astype(mxu_dtype),
                             (((1,), (1,)), ((), ())),
                             preferred_element_type=jnp.float32)     # [tq, Lk] f32
    # Scale the f32 logits (exact parity with the reference; VPU mul is filler).
    logits = logits * jnp.float32(1.0 / temperature)

    # Masked softmax (non memory-efficient variant), fused normalization:
    #   s1 = softmax(logits*m); s = s1*m / (sum(s1*m) + 1e-13)
    #     == (e*m) / (sum(e*m) + 1e-13*sum(e)),  e = exp(x - max(x)), x = logits*m
    x = logits * m
    e = jnp.exp(x - jnp.max(x, axis=-1, keepdims=True))
    p = e * m
    denom = (jnp.sum(p, axis=-1, keepdims=True)
             + jnp.float32(1e-13) * jnp.sum(e, axis=-1, keepdims=True))
    s = p * pl.reciprocal(denom, approx=False)    # exact: denom is only [tq, 1]

    # dropout(p=0.0) -> identity;  out = attn @ v (bf16 operands, f32 acc).
    sv_dtype = mxu_dtype if v.dtype == jnp.float32 else v.dtype
    out = lax.dot_general(s.astype(sv_dtype), v.astype(sv_dtype),
                          (((1,), (0,)), ((), ())),
                          preferred_element_type=jnp.float32)        # [tq, Dv] f32
    return out, s


def _sdpa_kernel(q_ref, k_ref, v_ref, mask_ref, out_ref, attn_ref, *,
                 temperature, mxu_dtype):
    out, s = _sdpa_body(q_ref, k_ref, v_ref, mask_ref,
                        temperature=temperature, mxu_dtype=mxu_dtype)
    out_ref[0] = out.astype(out_ref.dtype)
    attn_ref[0] = s.astype(attn_ref.dtype)


def _sdpa_kernel_no_attn(q_ref, k_ref, v_ref, mask_ref, out_ref, *,
                         temperature, mxu_dtype):
    out, _ = _sdpa_body(q_ref, k_ref, v_ref, mask_ref,
                        temperature=temperature, mxu_dtype=mxu_dtype)
    out_ref[0] = out.astype(out_ref.dtype)


def _estimate_vmem_bytes(*, block_q, Lk, D, Dv, q_isz, k_isz, v_isz, mask_isz,
                         out_isz, attn_isz, return_attn, kv_bufs):
    """Per-step VMEM estimate: double-buffered q/mask/out/attn tiles, K/V buffers,
    plus the f32 [block_q, Lk] softmax working set."""
    tile_bytes = (block_q * D * q_isz
                  + block_q * Lk * mask_isz
                  + block_q * Dv * out_isz
                  + (block_q * Lk * attn_isz if return_attn else 0))
    kv_bytes = Lk * D * k_isz + Lk * Dv * v_isz
    interm = 6 * block_q * Lk * 4
    return 2 * tile_bytes + kv_bufs * kv_bytes + interm


def scaled_dot_product_attention(q, k, v, mask, temperature, *,
                                 block_q=None, return_attn=True,
                                 attn_dtype=None, use_bf16_mxu=True):
    """Pallas implementation of ScaledDotProductAttention.forward (use_sparse=False)."""
    B, Lq, D = q.shape
    _, Lk, _ = k.shape
    _, _, Dv = v.shape
    assert k.shape[0] == B and k.shape[2] == D
    assert v.shape[0] == B and v.shape[1] == Lk
    assert mask.shape == (B, Lq, Lk)

    out_dtype = q.dtype
    attn_dtype = jnp.dtype(out_dtype if attn_dtype is None else attn_dtype)
    mxu_dtype = jnp.bfloat16 if (use_bf16_mxu and q.dtype == jnp.float32) else q.dtype

    # Shrink the [B, Lq, Lk] mask HBM stream and VMEM tile (0/1 is exact in bf16);
    # kernel widens it back to f32.  Already-narrow masks (bool/int8/bf16) pass through.
    if jnp.dtype(mask.dtype).itemsize > 2:
        mask = mask.astype(jnp.bfloat16)

    isz = lambda dt: jnp.dtype(dt).itemsize
    est = functools.partial(
        _estimate_vmem_bytes, Lk=Lk, D=D, Dv=Dv,
        q_isz=isz(q.dtype), k_isz=isz(k.dtype), v_isz=isz(v.dtype),
        mask_isz=isz(mask.dtype), out_isz=isz(out_dtype), attn_isz=isz(attn_dtype),
        return_attn=return_attn)

    # Generation-aware VMEM budget (v5e/v6e: 128 MiB, v7x: 64 MiB per TensorCore).
    try:
        vmem_cap = int(pltpu.get_tpu_info().vmem_capacity_bytes)
    except Exception:
        vmem_cap = 64 * 1024 * 1024  # conservative fallback (v7x per-TC)
    vmem_budget = int(0.72 * vmem_cap)

    # Lq tile: whole sequence when short; otherwise the largest MXU/lane-friendly
    # tile whose working set fits the per-core VMEM budget.
    if block_q is None:
        if Lq <= 256:
            block_q = Lq
        else:
            block_q = 8
            for cand in (256, 128, 64, 32, 16, 8):
                if est(block_q=cand, kv_bufs=2) <= vmem_budget:
                    block_q = cand
                    break

    # Single-buffer K/V (their block index only changes with the outer batch axis,
    # so the exposed DMA happens once per batch) when VMEM is tight.
    kv_bufs = 2
    if est(block_q=block_q, kv_bufs=2) > vmem_budget:
        kv_bufs = 1

    vmem_limit = int(min(vmem_budget,
                         max(16 * 1024 * 1024,
                             est(block_q=block_q, kv_bufs=kv_bufs) + (2 << 20))))

    # Ragged last Lq tile handled by Pallas (OOB input rows are row-confined garbage,
    # OOB output rows are masked on store) -> no jnp.pad / post-slice HBM copies.
    n_q = pl.cdiv(Lq, block_q)

    kv_mode = dict(pipeline_mode=pl.Buffered(1)) if kv_bufs == 1 else {}
    in_specs = [
        pl.BlockSpec((1, block_q, D), lambda b, i: (b, i, 0)),          # q tile
        pl.BlockSpec((1, Lk, D), lambda b, i: (b, 0, 0), **kv_mode),    # k (whole seq)
        pl.BlockSpec((1, Lk, Dv), lambda b, i: (b, 0, 0), **kv_mode),   # v (whole seq)
        pl.BlockSpec((1, block_q, Lk), lambda b, i: (b, i, 0)),         # mask tile
    ]
    out_spec_o = pl.BlockSpec((1, block_q, Dv), lambda b, i: (b, i, 0))
    out_spec_a = pl.BlockSpec((1, block_q, Lk), lambda b, i: (b, i, 0))

    kernel = functools.partial(
        _sdpa_kernel if return_attn else _sdpa_kernel_no_attn,
        temperature=float(temperature), mxu_dtype=mxu_dtype)

    if return_attn:
        out_shape = (jax.ShapeDtypeStruct((B, Lq, Dv), out_dtype),
                     jax.ShapeDtypeStruct((B, Lq, Lk), attn_dtype))
        out_specs = [out_spec_o, out_spec_a]
    else:
        out_shape = jax.ShapeDtypeStruct((B, Lq, Dv), out_dtype)
        out_specs = out_spec_o

    grid_spec = pltpu.PrefetchScalarGridSpec(
        num_scalar_prefetch=0,
        # Lq-tile axis innermost: k/v block indices are constant across it -> no re-DMA.
        grid=(B, n_q),
        in_specs=in_specs,
        out_specs=out_specs,
    )

    # Megacore: shard on the batch axis when possible so each TC keeps its own
    # per-batch K/V residency (splitting the i axis would duplicate K/V fetches).
    dim_sems = ("parallel", "arbitrary") if B > 1 else ("parallel", "parallel")

    return pl.pallas_call(
        kernel,
        out_shape=out_shape,
        grid_spec=grid_spec,
        compiler_params=pltpu.CompilerParams(
            dimension_semantics=dim_sems,
            vmem_limit_bytes=vmem_limit,
        ),
    )(q, k, v, mask)


def _reference(q, k, v, mask, temperature):
    """Plain-JAX reference mirroring the PyTorch forward (use_sparse=False)."""
    attn = jnp.einsum("bqd,bkd->bqk", q, k) / temperature
    x = attn * mask
    s = jax.nn.softmax(x, axis=2)
    s = s * mask
    s = s / (jnp.sum(s, axis=2, keepdims=True) + 1e-13)
    out = jnp.einsum("bqk,bkd->bqd", s, v)
    return out, s


if __name__ == "__main__":
    B, Lq, Lk, D, Dv = 2, 8, 8, 32, 32
    temperature = float(np.sqrt(D))

    key = jax.random.PRNGKey(0)
    kq, kk, kv_, km = jax.random.split(key, 4)
    q = jax.random.normal(kq, (B, Lq, D), dtype=jnp.float32)
    k = jax.random.normal(kk, (B, Lk, D), dtype=jnp.float32)
    v = jax.random.normal(kv_, (B, Lk, Dv), dtype=jnp.float32)
    mask = (jax.random.uniform(km, (B, Lq, Lk)) > 0.3).astype(jnp.float32)
    mask = mask.at[:, :, 0].set(1.0)  # avoid fully-masked rows

    out_ref, attn_ref = _reference(q, k, v, mask, temperature)

    # 1) exact f32 MXU path: tight check of the fused masked-softmax semantics.
    out, attn = scaled_dot_product_attention(q, k, v, mask, temperature,
                                             use_bf16_mxu=False)
    jax.block_until_ready((out, attn))
    np.testing.assert_allclose(np.asarray(out), np.asarray(out_ref),
                               rtol=1e-4, atol=1e-4)
    np.testing.assert_allclose(np.asarray(attn), np.asarray(attn_ref),
                               rtol=1e-4, atol=1e-4)

    # 2) default fast path: bf16 MXU operands, f32 softmax math.
    out_f, attn_f = scaled_dot_product_attention(q, k, v, mask, temperature)
    jax.block_until_ready((out_f, attn_f))
    np.testing.assert_allclose(np.asarray(out_f), np.asarray(out_ref),
                               rtol=4e-2, atol=4e-2)
    np.testing.assert_allclose(np.asarray(attn_f), np.asarray(attn_ref),
                               rtol=4e-2, atol=4e-2)

    # 3) ragged Lq (no padding / slicing copies), Lq tiling, bf16 attn writeback.
    Lq2 = 12
    kq2, km2 = jax.random.split(jax.random.PRNGKey(1), 2)
    q2 = jax.random.normal(kq2, (B, Lq2, D), dtype=jnp.float32)
    mask2 = (jax.random.uniform(km2, (B, Lq2, Lk)) > 0.3).astype(jnp.float32)
    mask2 = mask2.at[:, :, 0].set(1.0)
    out2_ref, attn2_ref = _reference(q2, k, v, mask2, temperature)
    out2, attn2 = scaled_dot_product_attention(
        q2, k, v, mask2, temperature, block_q=8,
        attn_dtype=jnp.bfloat16, use_bf16_mxu=False)
    jax.block_until_ready((out2, attn2))
    np.testing.assert_allclose(np.asarray(out2), np.asarray(out2_ref),
                               rtol=1e-4, atol=1e-4)
    np.testing.assert_allclose(np.asarray(attn2).astype(np.float32),
                               np.asarray(attn2_ref), rtol=1e-2, atol=1e-2)

    # 4) output-only variant (skips the dominant [B, Lq, Lk] attn writeback).
    out_only = scaled_dot_product_attention(q, k, v, mask, temperature,
                                            return_attn=False)
    out_only = jax.block_until_ready(out_only)
    np.testing.assert_allclose(np.asarray(out_only), np.asarray(out_ref),
                               rtol=4e-2, atol=4e-2)

    print("KERNEL_OK")
</pallas_src>

<mosaic_0001>
module attributes {stable_mosaic.version = 11 : i64} {
  func.func @_sdpa_kernel(%arg0: i32, %arg1: i32, %arg2: memref<1x8x32xf32, #tpu.memory_space<vmem>>, %arg3: memref<1x8x32xf32, #tpu.memory_space<vmem>>, %arg4: memref<1x8x32xf32, #tpu.memory_space<vmem>>, %arg5: memref<1x8x8xbf16, #tpu.memory_space<vmem>>, %arg6: memref<1x8x32xf32, #tpu.memory_space<vmem>>, %arg7: memref<1x8x8xf32, #tpu.memory_space<vmem>>) attributes {dimension_semantics = [#tpu.dimension_semantics<parallel>, #tpu.dimension_semantics<arbitrary>], iteration_bounds = array<i64: 2, 1>, scalar_prefetch = 0 : i64, scratch_operands = 0 : i64, tpu.core_type = #tpu.core_type<tc>, window_params = [{transform_indices = @transform_0, window_bounds = array<i64: 1, 8, 32>}, {transform_indices = @transform_1, window_bounds = array<i64: 1, 8, 32>}, {transform_indices = @transform_2, window_bounds = array<i64: 1, 8, 32>}, {transform_indices = @transform_3, window_bounds = array<i64: 1, 8, 8>}, {transform_indices = @transform_4, window_bounds = array<i64: 1, 8, 32>}, {transform_indices = @transform_5, window_bounds = array<i64: 1, 8, 8>}]} {
    %c0 = arith.constant 0 : index
    %c0_0 = arith.constant 0 : index
    %c0_1 = arith.constant 0 : index
    %0 = vector.load %arg2[%c0, %c0_0, %c0_1] : memref<1x8x32xf32, #tpu.memory_space<vmem>>, vector<1x8x32xf32>
    %1 = vector.shape_cast %0 : vector<1x8x32xf32> to vector<8x32xf32>
    %c0_2 = arith.constant 0 : index
    %c0_3 = arith.constant 0 : index
    %c0_4 = arith.constant 0 : index
    %2 = vector.load %arg3[%c0_2, %c0_3, %c0_4] : memref<1x8x32xf32, #tpu.memory_space<vmem>>, vector<1x8x32xf32>
    %3 = vector.shape_cast %2 : vector<1x8x32xf32> to vector<8x32xf32>
    %c0_5 = arith.constant 0 : index
    %c0_6 = arith.constant 0 : index
    %c0_7 = arith.constant 0 : index
    %4 = vector.load %arg4[%c0_5, %c0_6, %c0_7] : memref<1x8x32xf32, #tpu.memory_space<vmem>>, vector<1x8x32xf32>
    %5 = vector.shape_cast %4 : vector<1x8x32xf32> to vector<8x32xf32>
    %c0_8 = arith.constant 0 : index
    %c0_9 = arith.constant 0 : index
    %c0_10 = arith.constant 0 : index
    %6 = vector.load %arg5[%c0_8, %c0_9, %c0_10] : memref<1x8x8xbf16, #tpu.memory_space<vmem>>, vector<1x8x8xbf16>
    %7 = vector.shape_cast %6 : vector<1x8x8xbf16> to vector<8x8xbf16>
    %8 = arith.extf %7 : vector<8x8xbf16> to vector<8x8xf32>
    %cst = arith.constant dense<0.000000e+00> : vector<8x8xf32>
    %9 = tpu.matmul %1, %3, %cst {dimension_numbers = #tpu.dot_dimension_numbers<[1], [1], [0], [0], [0, 0, 1, 0], [], []>} : vector<8x32xf32>, vector<8x32xf32>, vector<8x8xf32> -> vector<8x8xf32>
    %cst_11 = arith.constant 0.176776692 : f32
    %10 = vector.broadcast %cst_11 : f32 to vector<8x8xf32>
    %11 = arith.mulf %9, %10 : vector<8x8xf32>
    %12 = arith.mulf %11, %8 : vector<8x8xf32>
    %cst_12 = arith.constant dense<0xFF800000> : vector<8xf32>
    %13 = vector.multi_reduction <maximumf>, %12, %cst_12 [1] : vector<8x8xf32> to vector<8xf32>
    %14 = vector.shape_cast %13 : vector<8xf32> to vector<8x1xf32>
    %15 = vector.broadcast %14 : vector<8x1xf32> to vector<8x8xf32>
    %16 = arith.subf %12, %15 : vector<8x8xf32>
    %17 = math.exp %16 : vector<8x8xf32>
    %18 = arith.mulf %17, %8 : vector<8x8xf32>
    %cst_13 = arith.constant dense<0.000000e+00> : vector<8xf32>
    %19 = vector.multi_reduction <add>, %18, %cst_13 [1] : vector<8x8xf32> to vector<8xf32>
    %20 = vector.shape_cast %19 : vector<8xf32> to vector<8x1xf32>
    %cst_14 = arith.constant dense<0.000000e+00> : vector<8xf32>
    %21 = vector.multi_reduction <add>, %17, %cst_14 [1] : vector<8x8xf32> to vector<8xf32>
    %22 = vector.shape_cast %21 : vector<8xf32> to vector<8x1xf32>
    %cst_15 = arith.constant 9.99999982E-14 : f32
    %23 = vector.broadcast %cst_15 : f32 to vector<8x1xf32>
    %24 = arith.mulf %23, %22 : vector<8x1xf32>
    %25 = arith.addf %20, %24 : vector<8x1xf32>
    %26 = tpu.reciprocal %25 : vector<8x1xf32> -> vector<8x1xf32>
    %27 = vector.broadcast %26 : vector<8x1xf32> to vector<8x8xf32>
    %28 = arith.mulf %18, %27 : vector<8x8xf32>
    %cst_16 = arith.constant dense<0.000000e+00> : vector<8x32xf32>
    %29 = tpu.matmul %28, %5, %cst_16 {dimension_numbers = #tpu.dot_dimension_numbers<[1], [0], [0], [1], [0, 0, 1, 1], [], []>} : vector<8x8xf32>, vector<8x32xf32>, vector<8x32xf32> -> vector<8x32xf32>
    %c0_17 = arith.constant 0 : index
    %c0_18 = arith.constant 0 : index
    %c0_19 = arith.constant 0 : index
    %30 = vector.load %arg6[%c0_17, %c0_18, %c0_19] : memref<1x8x32xf32, #tpu.memory_space<vmem>>, vector<1x8x32xf32>
    %31 = vector.shape_cast %30 : vector<1x8x32xf32> to vector<8x32xf32>
    %32 = vector.shape_cast %29 : vector<8x32xf32> to vector<1x8x32xf32>
    tpu.vector_store %arg6[%c0_17, %c0_18, %c0_19], %32 {strides = array<i32>} : memref<1x8x32xf32, #tpu.memory_space<vmem>>, vector<1x8x32xf32>,
    %c0_20 = arith.constant 0 : index
    %c0_21 = arith.constant 0 : index
    %c0_22 = arith.constant 0 : index
    %33 = vector.load %arg7[%c0_20, %c0_21, %c0_22] : memref<1x8x8xf32, #tpu.memory_space<vmem>>, vector<1x8x8xf32>
    %34 = vector.shape_cast %33 : vector<1x8x8xf32> to vector<8x8xf32>
    %35 = vector.shape_cast %28 : vector<8x8xf32> to vector<1x8x8xf32>
    tpu.vector_store %arg7[%c0_20, %c0_21, %c0_22], %35 {strides = array<i32>} : memref<1x8x8xf32, #tpu.memory_space<vmem>>, vector<1x8x8xf32>,
    return
  }
  func.func @transform_0(%arg0: i32, %arg1: i32) -> (i32, i32, i32) {
    %c0_i32 = arith.constant 0 : i32
    %c0_i32_0 = arith.constant 0 : i32
    return %arg0, %arg1, %c0_i32 : i32, i32, i32
  }
  func.func @transform_1(%arg0: i32, %arg1: i32) -> (i32, i32, i32) {
    %c0_i32 = arith.constant 0 : i32
    %c0_i32_0 = arith.constant 0 : i32
    %c0_i32_1 = arith.constant 0 : i32
    return %arg0, %c0_i32, %c0_i32_0 : i32, i32, i32
  }
  func.func @transform_2(%arg0: i32, %arg1: i32) -> (i32, i32, i32) {
    %c0_i32 = arith.constant 0 : i32
    %c0_i32_0 = arith.constant 0 : i32
    %c0_i32_1 = arith.constant 0 : i32
    return %arg0, %c0_i32, %c0_i32_0 : i32, i32, i32
  }
  func.func @transform_3(%arg0: i32, %arg1: i32) -> (i32, i32, i32) {
    %c0_i32 = arith.constant 0 : i32
    %c0_i32_0 = arith.constant 0 : i32
    return %arg0, %arg1, %c0_i32 : i32, i32, i32
  }
  func.func @transform_4(%arg0: i32, %arg1: i32) -> (i32, i32, i32) {
    %c0_i32 = arith.constant 0 : i32
    %c0_i32_0 = arith.constant 0 : i32
    return %arg0, %arg1, %c0_i32 : i32, i32, i32
  }
  func.func @transform_5(%arg0: i32, %arg1: i32) -> (i32, i32, i32) {
    %c0_i32 = arith.constant 0 : i32
    %c0_i32_0 = arith.constant 0 : i32
    return %arg0, %arg1, %c0_i32 : i32, i32, i32
  }
}

</mosaic_0001>

<llo_original>
// kernel: tpu_custom_call.1
$region0: #{tpu_custom_call.1}
  #allocation0 [shape = 'u32[]', space=smem, size = 0x4, offset = 0x4, fixed_abs, tag = 'smem constant byte address 0x4 - core index']
  #allocation1 [shape = 'u32[72,128]{1,0:T(1,128)}', space=vmem, size = 0x9000, scoped, tag = 'internal scratch']
  %s0 = inlined_call_operand.hbm [shape: f32[2,8,32], index: 0, kind: input, shape index: {}]
  %s1 = inlined_call_operand.hbm [shape: f32[2,8,32], index: 1, kind: input, shape index: {}]
  %s2 = inlined_call_operand.hbm [shape: f32[2,8,32], index: 2, kind: input, shape index: {}]
  %s3 = inlined_call_operand.hbm [shape: bf16[2,8,8], index: 3, kind: input, shape index: {}]
  %s4 = inlined_call_operand.hbm [shape: f32[2,8,32], index: 4, kind: output, shape index: {0}]
  %s5 = inlined_call_operand.hbm [shape: f32[2,8,8], index: 5, kind: output, shape index: {1}]
  %6 = xla_tuple %s4, %s5
  %s7 = sld [smem:[#allocation0]]
  $region73: #{tpu_custom_call.1} parent=0
    _
  %s9 = ssub.s32 1, %s7
  %s10 = scalar_select 0, %s9, %s7
  $region1: #{tpu_custom_call.1} parent=0
    #allocation2 [shape = 'u8[8192]{0}', space=vmem, size = 0x2000, scoped, tag = 'input window, operand 0']
    #allocation3 [shape = 's32[2]{0}', space=sflag, size = 0x8, scoped, tag = 'scoped memory for tpu_custom_call.1']
    #allocation4 [shape = 's32[2]{0}', space=sflag, size = 0x8, scoped, tag = 'scoped memory for tpu_custom_call.1']
    #allocation5 [shape = 'u8[8192]{0}', space=vmem, size = 0x2000, scoped, tag = 'input window, operand 1']
    #allocation6 [shape = 's32[2]{0}', space=sflag, size = 0x8, scoped, tag = 'scoped memory for tpu_custom_call.1']
    #allocation7 [shape = 'u8[8192]{0}', space=vmem, size = 0x2000, scoped, tag = 'input window, operand 2']
    #allocation8 [shape = 'u8[4096]{0}', space=vmem, size = 0x1000, scoped, tag = 'input window, operand 3']
    #allocation9 [shape = 's32[2]{0}', space=sflag, size = 0x8, scoped, tag = 'scoped memory for tpu_custom_call.1']
    #allocation10 [shape = 'u8[8192]{0}', space=vmem, size = 0x2000, scoped, tag = 'output window, operand 0']
    #allocation11 [shape = 'u8[8192]{0}', space=vmem, size = 0x2000, scoped, tag = 'output window, operand 1']
    #allocation12 [shape = 's32[2]{0}', space=sflag, size = 0x8, scoped, tag = 'scoped memory for tpu_custom_call.1']
    %11 = vsyncpa [#allocation3], 0
    %s12 = scalar_lea.sflag [#allocation3], 1
    %13 = vsyncpa %s12, 0
    %14 = vsyncpa [#allocation6], 0
    %s15 = scalar_lea.sflag [#allocation6], 1
    %16 = vsyncpa %s15, 0
    %17 = vsyncpa [#allocation9], 0
    %s18 = scalar_lea.sflag [#allocation9], 1
    %19 = vsyncpa %s18, 0
    %20 = vsyncpa [#allocation4], 0
    %s21 = scalar_lea.sflag [#allocation4], 1
    %22 = vsyncpa %s21, 0
    %23 = vsyncpa [#allocation12], 0
    %s24 = scalar_lea.sflag [#allocation12], 1
    %25 = vsyncpa %s24, 0
    loop: start=0, step=1, limit=4
    $region2: #{tpu_custom_call.1} parent=1 // loop_pre_header
      _
    $region3: #{tpu_custom_call.1} parent=1 // loop_header
      %s27 = sphi 0, %s31
      %p28 = scmp.ge.s32.totalorder %s27, 4
      %s34 = sphi 0, %s46
      %s35 = sphi 0, %s42
      %s36 = sphi 0, %s34
      %s37 = sphi 0, %s35
      %s38 = sphi 0, %s36
      %s39 = sphi 0, %s37
      %s51 = sphi 0, %s53
      %s54 = sphi 0, %s51
      %s55 = sphi 0, %s54
      %s71 = sphi 0, %s55
      %s77 = sphi 0, %s79
      %s80 = sphi 0, %s77
      %s81 = sphi 0, %s80
      %s97 = sphi 0, %s81
      %s103 = sphi 0, %s105
      %s106 = sphi 0, %s103
      %s107 = sphi 0, %s106
      %s123 = sphi 0, %s107
      %s131 = sphi 0, %s133
      %s134 = sphi 0, %s131
      %s135 = sphi 0, %s134
      %s151 = sphi 0, %s135
      %s159 = sphi 0, %s161
      %s162 = sphi 0, %s159
      %s163 = sphi 0, %s162
      %s179 = sphi 0, %s163
      %s187 = sphi 0, %s189
      %s190 = sphi 0, %s187
      %s191 = sphi 0, %s190
      %s207 = sphi 0, %s191
    $region4: #{tpu_custom_call.1} parent=1 // loop_header_branch
      %30 = sbr.rel (%p28) target = $region8
    $region5: #{tpu_custom_call.1} parent=1 // loop_body
      %s32 = ssub.s32 %s27, 1
      %s33 = ssub.s32 %s27, 2
      %s40 = sadd.s32 1, %s35
      %p41 = scmp.ge.s32.totalorder %s40, 1
      %s42 = scalar_select %p41, 0, %s40
      %s43 = sadd.s32 1, %s34
      %s44 = scalar_select %p41, %s43, %s34
      %p45 = scmp.ge.s32.totalorder %s44, 2
      %s46 = scalar_select %p45, 0, %s44
      %s47 = ssub.s32 %s34, %s46
      %s48 = ssub.s32 %s35, %s42
      %s49 = sor.u32 %s47, %s48
      %p50 = scmp.eq.s32.totalorder %s49, 0
      %s52 = sadd.s32 %s51, 1
      %s53 = scalar_select %p50, %s51, %s52
      %p56 = pneg %p50
      %p57 = scmp.eq.s32.totalorder %s27, 1
      %p58 = por %p56, %p57
      %p59 = scmp.ne.s32.totalorder %s51, %s54
      %p60 = scmp.eq.s32.totalorder %s27, 0
      %p61 = por %p59, %p60
      %p62 = scmp.ne.s32.totalorder %s51, %s54
      %p63 = scmp.eq.s32.totalorder %s32, 1
      %p64 = por %p62, %p63
      %p65 = scmp.ne.s32.totalorder %s54, %s55
      %p66 = scmp.eq.s32.totalorder %s32, 0
      %p67 = por %p65, %p66
      %p68 = scmp.ne.s32.totalorder %s54, %s55
      %p69 = scmp.eq.s32.totalorder %s33, 1
      %p70 = por %p68, %p69
      %p72 = scmp.ne.s32.totalorder %s55, %s71
      %p73 = scmp.eq.s32.totalorder %s33, 0
      %p74 = por %p72, %p73
      %s75 = ssub.s32 %s34, %s46
      %p76 = scmp.eq.s32.totalorder %s75, 0
      %s78 = sadd.s32 %s77, 1
      %s79 = scalar_select %p76, %s77, %s78
      %p82 = pneg %p76
      %p83 = scmp.eq.s32.totalorder %s27, 1
      %p84 = por %p82, %p83
      %p85 = scmp.ne.s32.totalorder %s77, %s80
      %p86 = scmp.eq.s32.totalorder %s27, 0
      %p87 = por %p85, %p86
      %p88 = scmp.ne.s32.totalorder %s77, %s80
      %p89 = scmp.eq.s32.totalorder %s32, 1
      %p90 = por %p88, %p89
      %p91 = scmp.ne.s32.totalorder %s80, %s81
      %p92 = scmp.eq.s32.totalorder %s32, 0
      %p93 = por %p91, %p92
      %p94 = scmp.ne.s32.totalorder %s80, %s81
      %p95 = scmp.eq.s32.totalorder %s33, 1
      %p96 = por %p94, %p95
      %p98 = scmp.ne.s32.totalorder %s81, %s97
      %p99 = scmp.eq.s32.totalorder %s33, 0
      %p100 = por %p98, %p99
      %s101 = ssub.s32 %s34, %s46
      %p102 = scmp.eq.s32.totalorder %s101, 0
      %s104 = sadd.s32 %s103, 1
      %s105 = scalar_select %p102, %s103, %s104
      %p108 = pneg %p102
      %p109 = scmp.eq.s32.totalorder %s27, 1
      %p110 = por %p108, %p109
      %p111 = scmp.ne.s32.totalorder %s103, %s106
      %p112 = scmp.eq.s32.totalorder %s27, 0
      %p113 = por %p111, %p112
      %p114 = scmp.ne.s32.totalorder %s103, %s106
      %p115 = scmp.eq.s32.totalorder %s32, 1
      %p116 = por %p114, %p115
      %p117 = scmp.ne.s32.totalorder %s106, %s107
      %p118 = scmp.eq.s32.totalorder %s32, 0
      %p119 = por %p117, %p118
      %p120 = scmp.ne.s32.totalorder %s106, %s107
      %p121 = scmp.eq.s32.totalorder %s33, 1
      %p122 = por %p120, %p121
      %p124 = scmp.ne.s32.totalorder %s107, %s123
      %p125 = scmp.eq.s32.totalorder %s33, 0
      %p126 = por %p124, %p125
      %s127 = ssub.s32 %s34, %s46
      %s128 = ssub.s32 %s35, %s42
      %s129 = sor.u32 %s127, %s128
      %p130 = scmp.eq.s32.totalorder %s129, 0
      %s132 = sadd.s32 %s131, 1
      %s133 = scalar_select %p130, %s131, %s132
      %p136 = pneg %p130
      %p137 = scmp.eq.s32.totalorder %s27, 1
      %p138 = por %p136, %p137
      %p139 = scmp.ne.s32.totalorder %s131, %s134
      %p140 = scmp.eq.s32.totalorder %s27, 0
      %p141 = por %p139, %p140
      %p142 = scmp.ne.s32.totalorder %s131, %s134
      %p143 = scmp.eq.s32.totalorder %s32, 1
      %p144 = por %p142, %p143
      %p145 = scmp.ne.s32.totalorder %s134, %s135
      %p146 = scmp.eq.s32.totalorder %s32, 0
      %p147 = por %p145, %p146
      %p148 = scmp.ne.s32.totalorder %s134, %s135
      %p149 = scmp.eq.s32.totalorder %s33, 1
      %p150 = por %p148, %p149
      %p152 = scmp.ne.s32.totalorder %s135, %s151
      %p153 = scmp.eq.s32.totalorder %s33, 0
      %p154 = por %p152, %p153
      %s155 = ssub.s32 %s34, %s46
      %s156 = ssub.s32 %s35, %s42
      %s157 = sor.u32 %s155, %s156
      %p158 = scmp.eq.s32.totalorder %s157, 0
      %s160 = sadd.s32 %s159, 1
      %s161 = scalar_select %p158, %s159, %s160
      %p164 = pneg %p158
      %p165 = scmp.eq.s32.totalorder %s27, 1
      %p166 = por %p164, %p165
      %p167 = scmp.ne.s32.totalorder %s159, %s162
      %p168 = scmp.eq.s32.totalorder %s27, 0
      %p169 = por %p167, %p168
      %p170 = scmp.ne.s32.totalorder %s159, %s162
      %p171 = scmp.eq.s32.totalorder %s32, 1
      %p172 = por %p170, %p171
      %p173 = scmp.ne.s32.totalorder %s162, %s163
      %p174 = scmp.eq.s32.totalorder %s32, 0
      %p175 = por %p173, %p174
      %p176 = scmp.ne.s32.totalorder %s162, %s163
      %p177 = scmp.eq.s32.totalorder %s33, 1
      %p178 = por %p176, %p177
      %p180 = scmp.ne.s32.totalorder %s163, %s179
      %p181 = scmp.eq.s32.totalorder %s33, 0
      %p182 = por %p180, %p181
      %s183 = ssub.s32 %s34, %s46
      %s184 = ssub.s32 %s35, %s42
      %s185 = sor.u32 %s183, %s184
      %p186 = scmp.eq.s32.totalorder %s185, 0
      %s188 = sadd.s32 %s187, 1
      %s189 = scalar_select %p186, %s187, %s188
      %p192 = pneg %p186
      %p193 = scmp.eq.s32.totalorder %s27, 1
      %p194 = por %p192, %p193
      %p195 = scmp.ne.s32.totalorder %s187, %s190
      %p196 = scmp.eq.s32.totalorder %s27, 0
      %p197 = por %p195, %p196
      %p198 = scmp.ne.s32.totalorder %s187, %s190
      %p199 = scmp.eq.s32.totalorder %s32, 1
      %p200 = por %p198, %p199
      %p201 = scmp.ne.s32.totalorder %s190, %s191
      %p202 = scmp.eq.s32.totalorder %s32, 0
      %p203 = por %p201, %p202
      %p204 = scmp.ne.s32.totalorder %s190, %s191
      %p205 = scmp.eq.s32.totalorder %s33, 1
      %p206 = por %p204, %p205
      %p208 = scmp.ne.s32.totalorder %s191, %s207
      %p209 = scmp.eq.s32.totalorder %s33, 0
      %p210 = por %p208, %p209
      %p211 = scmp.le.s32.totalorder 1, %s27
      %p212 = scmp.lt.s32.totalorder %s27, 3
      %p213 = pnand %p211, %p212
      %p214 = pneg %p213
      // Predicated region
      $region9: #{tpu_custom_call.1} parent=5 // pred_check
        _
      $region10: #{tpu_custom_call.1} parent=5 // pred_check_branch
        %216 = sbr.rel (%p213) target = $region12
      $region11: #{tpu_custom_call.1} parent=5 // pred_region
        %s217 = ssub.s32 %s27, 1
      $region12: #{tpu_custom_call.1} parent=5 // pred_fallthru
        _
      %p218 = scmp.lt.s32.totalorder %s27, 2
      // Predicated region
      $region13: #{tpu_custom_call.1} parent=5 // pred_check
        %p219 = pneg %p218
      $region14: #{tpu_custom_call.1} parent=5 // pred_check_branch
        %221 = sbr.rel (%p219) target = $region16
      $region15: #{tpu_custom_call.1} parent=5 // pred_region
        // Predicated region
        $region17: #{tpu_custom_call.1} parent=15 // pred_check
          %p222 = pneg %p61
        $region18: #{tpu_custom_call.1} parent=15 // pred_check_branch
          %224 = sbr.rel (%p222) target = $region20
        $region19: #{tpu_custom_call.1} parent=15 // pred_region
          %s225 = sand.u32 %s51, 1
          %s226 = scalar_lea.sflag [#allocation3], %s225
          %s227 = sand.u32 %s51, 1
          %s228 = smul.addr %s227, 8
          %s229 = scalar_lea.vmem [#allocation2], %s228
          %231 = vsyncadd %s226, 0
          %s232 = sadd.s32 %s35, %s34
          %s233 = smul.addr %s232, 8
          %s234 = scalar_lea.hbm %s0, %s233
          %s236 = sshll.u32 %s234, 4
          %s237 = int_to_ptr.hbm [resolvable:$true] %s236
          %s238 = sshll.u32 %s229, 4
          %s239 = int_to_ptr.vmem [resolvable:$true] %s238
          %241 = dma.hbm_to_vmem [thread:$0]  %s237, 128, %s239, %s226
        $region20: #{tpu_custom_call.1} parent=15 // pred_fallthru
          _
        // Predicated region
        $region21: #{tpu_custom_call.1} parent=15 // pred_check
          %p242 = pneg %p87
        $region22: #{tpu_custom_call.1} parent=15 // pred_check_branch
          %244 = sbr.rel (%p242) target = $region24
        $region23: #{tpu_custom_call.1} parent=15 // pred_region
          %s245 = sand.u32 %s27, 1
          %s246 = scalar_lea.sflag [#allocation6], %s245
          %s247 = sand.u32 %s77, 1
          %s248 = smul.addr %s247, 8
          %s249 = scalar_lea.vmem [#allocation5], %s248
          %251 = vsyncadd %s246, 0
          %s252 = smul.addr %s34, 8
          %s253 = scalar_lea.hbm %s1, %s252
          %s255 = sshll.u32 %s253, 4
          %s256 = int_to_ptr.hbm [resolvable:$true] %s255
          %s257 = sshll.u32 %s249, 4
          %s258 = int_to_ptr.vmem [resolvable:$true] %s257
          %260 = dma.hbm_to_vmem [thread:$0]  %s256, 128, %s258, %s246
        $region24: #{tpu_custom_call.1} parent=15 // pred_fallthru
          _
        // Predicated region
        $region25: #{tpu_custom_call.1} parent=15 // pred_check
          %p261 = pneg %p113
        $region26: #{tpu_custom_call.1} parent=15 // pred_check_branch
          %263 = sbr.rel (%p261) target = $region28
        $region27: #{tpu_custom_call.1} parent=15 // pred_region
          %s264 = sand.u32 %s27, 1
          %s265 = scalar_lea.sflag [#allocation6], %s264
          %s266 = sand.u32 %s103, 1
          %s267 = smul.addr %s266, 8
          %s268 = scalar_lea.vmem [#allocation7], %s267
          %270 = vsyncadd %s265, 0
          %s271 = smul.addr %s34, 8
          %s272 = scalar_lea.hbm %s2, %s271
          %s274 = sshll.u32 %s272, 4
          %s275 = int_to_ptr.hbm [resolvable:$true] %s274
          %s276 = sshll.u32 %s268, 4
          %s277 = int_to_ptr.vmem [resolvable:$true] %s276
          %279 = dma.hbm_to_vmem [thread:$0]  %s275, 128, %s277, %s265
        $region28: #{tpu_custom_call.1} parent=15 // pred_fallthru
          _
        // Predicated region
        $region29: #{tpu_custom_call.1} parent=15 // pred_check
          %p280 = pneg %p141
        $region30: #{tpu_custom_call.1} parent=15 // pred_check_branch
          %282 = sbr.rel (%p280) target = $region32
        $region31: #{tpu_custom_call.1} parent=15 // pred_region
          %s283 = sand.u32 %s131, 1
          %s284 = scalar_lea.sflag [#allocation9], %s283
          %s285 = sand.u32 %s131, 1
          %s286 = smul.addr %s285, 4
          %s287 = scalar_lea.vmem [#allocation8], %s286
          %289 = vsyncadd %s284, 0
          %s290 = sadd.s32 %s35, %s34
          %s291 = smul.addr %s290, 4
          %s292 = scalar_lea.hbm %s3, %s291
          %s294 = sshll.u32 %s292, 4
          %s295 = int_to_ptr.hbm [resolvable:$true] %s294
          %s296 = sshll.u32 %s287, 4
          %s297 = int_to_ptr.vmem [resolvable:$true] %s296
          %299 = dma.hbm_to_vmem [thread:$0]  %s295, 64, %s297, %s284
        $region32: #{tpu_custom_call.1} parent=15 // pred_fallthru
          _
      $region16: #{tpu_custom_call.1} parent=5 // pred_fallthru
        _
      %p300 = scmp.le.s32.totalorder 1, %s27
      %p301 = scmp.lt.s32.totalorder %s27, 3
      %p302 = pnand %p300, %p301
      %p303 = pneg %p302
      // Predicated region
      $region33: #{tpu_custom_call.1} parent=5 // pred_check
        _
      $region34: #{tpu_custom_call.1} parent=5 // pred_check_branch
        %305 = sbr.rel (%p302) target = $region36
      $region35: #{tpu_custom_call.1} parent=5 // pred_region
        %s306 = ssub.s32 %s27, 1
        %s307 = sand.u32 %s54, 1
        %s308 = scalar_lea.sflag [#allocation3], %s307
        %s309 = sand.u32 %s54, 1
        %s310 = smul.addr %s309, 8
        %s311 = scalar_lea.vmem [#allocation2], %s310
        // Predicated region
        $region37: #{tpu_custom_call.1} parent=35 // pred_check
          %p312 = pneg %p67
        $region38: #{tpu_custom_call.1} parent=35 // pred_check_branch
          %314 = sbr.rel (%p312) target = $region40
        $region39: #{tpu_custom_call.1} parent=35 // pred_region
          %316 = dma.done %s308, 128
        $region40: #{tpu_custom_call.1} parent=35 // pred_fallthru
          _
        %s317 = sand.u32 %s32, 1
        %s318 = scalar_lea.sflag [#allocation6], %s317
        %s319 = sand.u32 %s80, 1
        %s320 = smul.addr %s319, 8
        %s321 = scalar_lea.vmem [#allocation5], %s320
        // Predicated region
        $region41: #{tpu_custom_call.1} parent=35 // pred_check
          %p322 = pneg %p93
        $region42: #{tpu_custom_call.1} parent=35 // pred_check_branch
          %324 = sbr.rel (%p322) target = $region44
        $region43: #{tpu_custom_call.1} parent=35 // pred_region
          %326 = dma.done %s318, 128
        $region44: #{tpu_custom_call.1} parent=35 // pred_fallthru
          _
        %s327 = sand.u32 %s32, 1
        %s328 = scalar_lea.sflag [#allocation6], %s327
        %s329 = sand.u32 %s106, 1
        %s330 = smul.addr %s329, 8
        %s331 = scalar_lea.vmem [#allocation7], %s330
        // Predicated region
        $region45: #{tpu_custom_call.1} parent=35 // pred_check
          %p332 = pneg %p119
        $region46: #{tpu_custom_call.1} parent=35 // pred_check_branch
          %334 = sbr.rel (%p332) target = $region48
        $region47: #{tpu_custom_call.1} parent=35 // pred_region
          %336 = dma.done %s328, 128
        $region48: #{tpu_custom_call.1} parent=35 // pred_fallthru
          _
        %s337 = sand.u32 %s134, 1
        %s338 = scalar_lea.sflag [#allocation9], %s337
        %s339 = sand.u32 %s134, 1
        %s340 = smul.addr %s339, 4
        %s341 = scalar_lea.vmem [#allocation8], %s340
        // Predicated region
        $region49: #{tpu_custom_call.1} parent=35 // pred_check
          %p342 = pneg %p147
        $region50: #{tpu_custom_call.1} parent=35 // pred_check_branch
          %344 = sbr.rel (%p342) target = $region52
        $region51: #{tpu_custom_call.1} parent=35 // pred_region
          %346 = dma.done %s338, 64
        $region52: #{tpu_custom_call.1} parent=35 // pred_fallthru
          _
        %s347 = sand.u32 %s54, 1
        %s348 = scalar_lea.sflag [#allocation3], %s347
        %s349 = sand.u32 %s54, 1
        %s350 = smul.addr %s349, 8
        %s351 = scalar_lea.vmem [#allocation2], %s350
        %p352 = pneg %p67
        %p353 = pneg %p64
        %s354 = sand.u32 %s32, 1
        %s355 = scalar_lea.sflag [#allocation6], %s354
        %s356 = sand.u32 %s80, 1
        %s357 = smul.addr %s356, 8
        %s358 = scalar_lea.vmem [#allocation5], %s357
        %p359 = pneg %p93
        %p360 = pneg %p90
        %s361 = sand.u32 %s32, 1
        %s362 = scalar_lea.sflag [#allocation6], %s361
        %s363 = sand.u32 %s106, 1
        %s364 = smul.addr %s363, 8
        %s365 = scalar_lea.vmem [#allocation7], %s364
        %p366 = pneg %p119
        %p367 = pneg %p116
        %s368 = sand.u32 %s134, 1
        %s369 = scalar_lea.sflag [#allocation9], %s368
        %s370 = sand.u32 %s134, 1
        %s371 = smul.addr %s370, 4
        %s372 = scalar_lea.vmem [#allocation8], %s371
        %p373 = pneg %p147
        %p374 = pneg %p144
        %p375 = pneg %p175
        %p376 = pneg %p172
        %s377 = sand.u32 %s162, 1
        %s378 = scalar_lea.sflag [#allocation4], %s377
        %s379 = sand.u32 %s162, 1
        %s380 = smul.addr %s379, 8
        %s381 = scalar_lea.vmem [#allocation10], %s380
        %p382 = pneg %p203
        %p383 = pneg %p200
        %s384 = sand.u32 %s190, 1
        %s385 = scalar_lea.sflag [#allocation12], %s384
        %s386 = sand.u32 %s190, 1
        %s387 = smul.addr %s386, 8
        %s388 = scalar_lea.vmem [#allocation11], %s387
        %v389 = vld [vmem:[%s311] sm:$0xff]
        %v390 = vld [vmem:[%s321] sm:$0xff]
        %v391 = vld [vmem:[%s331] sm:$0xff]
        %v392 = vld [vmem:[%s341] sm:$0xf]
        %v393 = vunpack.c.l.bf16 %v392
        %vm394 = vcmask 261120
        %v396 = vsel %vm394, %v389, 0
        %v399 = vsel %vm394, %v390, 0
        %401 = vmatpush.xpose.msra.mxu0 0.0
        %402 = vmatpush.xpose.msra.mxu0 0.0
        %403 = vmatpush.xpose.msra.mxu0 0.0
        %404 = vmatpush.xpose.msra.mxu0 0.0
        %405 = vmatpush.xpose.msra.mxu0 0.0
        %406 = vmatpush.xpose.msra.mxu0 0.0
        %407 = vmatpush.xpose.msra.mxu0 0.0
        %408 = vmatpush.xpose.msra.mxu0 0.0
        %409 = vmatpush.xpose.msra.mxu0 0.0
        %410 = vmatpush.xpose.msra.mxu0 0.0
        %411 = vmatpush.xpose.msra.mxu0 0.0
        %412 = vmatpush.xpose.msra.mxu0 0.0
        %413 = vmatpush.xpose.msra.mxu0 0.0
        %414 = vmatpush.xpose.msra.mxu0 0.0
        %415 = vmatpush.xpose.msra.mxu0 0.0
        %416 = vmatpush.xpose.msra.mxu0 %v399
        %417 = vmatmul.f32.gmra.mxu0 %v396
        %v418 = vpop.f32.mrf.mxu0
        %v419 = vadd.f32 0.0, %v418
        %420 = vdwg.mxu0
        %v421 = vmul.f32 %v419, 0.17677669
        %v422 = vmul.f32 %v421, %v393
        %vm423 = vcmask 64512
        %v424 = vsel %vm423, %v422, -inf
        %425 = vmax.xlane.f32.xlu0 %v424
        %v426 = vpop.xlane.xlu0 %425
        %v427 = vsub.f32 %v422, %v426
        %v428 = vmul.f32 %v427, 1.442695
        %v429 = vpow.pop %v428
        %v430 = vmul.f32 %v429, %v393
        %v431 = vsel %vm423, %v430, 0.0
        %432 = vadd.xlane.f32.xlu0 %v431
        %v433 = vpop.xlane.xlu0 %432
        %v434 = vsel %vm423, %v429, 0.0
        %435 = vadd.xlane.f32.xlu0 %v434
        %v436 = vpop.xlane.xlu0 %435
        %v437 = vmul.f32 %v436, 1e-13
        %v438 = vadd.f32 %v433, %v437
        %v439 = vrcp.pop %v438
        %v440 = vmul.f32 %v438, %v439
        %v441 = vsub.f32 1.0, %v440
        %v442 = vmul.f32 %v439, %v441
        %v443 = vadd.f32 %v439, %v442
        %vm444 = vweird.f32 %v438
        %vm445 = vweird.f32 %v439
        %vm446 = vmor %vm444, %vm445
        %v447 = vsel %vm446, %v439, %v443
        %v448 = vand.u32 2147483647, %v438
        %vm449 = vcmp.eq.f32.partialorder %v448, 8.507059e+37
        %v450 = vand.u32 %v438, 2147483648
        %v451 = vor.u32 1.1754944e-38, %v450
        %v452 = vsel %vm449, %v451, %v447
        %v453 = vmul.f32 %v430, %v452
        %v455 = vsel %vm423, %v453, 0
        %457 = vmatpush.msra.mxu0 0.0
        %458 = vmatpush.msra.mxu0 0.0
        %459 = vmatpush.msra.mxu0 0.0
        %460 = vmatpush.msra.mxu0 0.0
        %461 = vmatpush.msra.mxu0 0.0
        %462 = vmatpush.msra.mxu0 0.0
        %463 = vmatpush.msra.mxu0 0.0
        %464 = vmatpush.msra.mxu0 0.0
        %465 = vmatpush.msra.mxu0 0.0
        %466 = vmatpush.msra.mxu0 0.0
        %467 = vmatpush.msra.mxu0 0.0
        %468 = vmatpush.msra.mxu0 0.0
        %469 = vmatpush.msra.mxu0 0.0
        %470 = vmatpush.msra.mxu0 0.0
        %471 = vmatpush.msra.mxu0 0.0
        %472 = vmatpush.msra.mxu0 %v391
        %473 = vmatmul.f32.gmra.mxu0 %v455
        %v474 = vpop.f32.mrf.mxu0
        %v475 = vadd.f32 0.0, %v474
        %476 = vdwg.mxu0
        %477 = vst.msk [vmem:[%s381] sm:$0xff] %vm394, %v475
        %478 = vst.msk [vmem:[%s388] sm:$0xff] %vm423, %v453
        %s479 = sand.u32 %s162, 1
        %s480 = scalar_lea.sflag [#allocation4], %s479
        %s481 = sand.u32 %s162, 1
        %s482 = smul.addr %s481, 8
        %s483 = scalar_lea.vmem [#allocation10], %s482
        %s484 = sand.u32 %s190, 1
        %s485 = scalar_lea.sflag [#allocation12], %s484
        %s486 = sand.u32 %s190, 1
        %s487 = smul.addr %s486, 8
        %s488 = scalar_lea.vmem [#allocation11], %s487
        // Predicated region
        $region53: #{tpu_custom_call.1} parent=35 // pred_check
          %p489 = pneg %p172
        $region54: #{tpu_custom_call.1} parent=35 // pred_check_branch
          %491 = sbr.rel (%p489) target = $region56
        $region55: #{tpu_custom_call.1} parent=35 // pred_region
          %493 = vsyncadd %s480, 0
          %s494 = sadd.s32 %s37, %s36
          %s495 = smul.addr %s494, 8
          %s496 = scalar_lea.hbm %s4, %s495
          %s498 = sshll.u32 %s483, 4
          %s499 = int_to_ptr.vmem [resolvable:$true] %s498
          %s500 = sshll.u32 %s496, 4
          %s501 = int_to_ptr.hbm [resolvable:$true] %s500
          %503 = dma.vmem_to_hbm [thread:$0]  %s499, 128, %s501, %s480
        $region56: #{tpu_custom_call.1} parent=35 // pred_fallthru
          _
        // Predicated region
        $region57: #{tpu_custom_call.1} parent=35 // pred_check
          %p504 = pneg %p200
        $region58: #{tpu_custom_call.1} parent=35 // pred_check_branch
          %506 = sbr.rel (%p504) target = $region60
        $region59: #{tpu_custom_call.1} parent=35 // pred_region
          %508 = vsyncadd %s485, 0
          %s509 = sadd.s32 %s37, %s36
          %s510 = smul.addr %s509, 8
          %s511 = scalar_lea.hbm %s5, %s510
          %s513 = sshll.u32 %s488, 4
          %s514 = int_to_ptr.vmem [resolvable:$true] %s513
          %s515 = sshll.u32 %s511, 4
          %s516 = int_to_ptr.hbm [resolvable:$true] %s515
          %518 = dma.vmem_to_hbm [thread:$0]  %s514, 128, %s516, %s485
        $region60: #{tpu_custom_call.1} parent=35 // pred_fallthru
          _
      $region36: #{tpu_custom_call.1} parent=5 // pred_fallthru
        _
      %p519 = scmp.le.s32.totalorder 2, %s27
      // Predicated region
      $region61: #{tpu_custom_call.1} parent=5 // pred_check
        %p520 = pneg %p519
      $region62: #{tpu_custom_call.1} parent=5 // pred_check_branch
        %522 = sbr.rel (%p520) target = $region64
      $region63: #{tpu_custom_call.1} parent=5 // pred_region
        %s523 = ssub.s32 %s27, 2
        // Predicated region
        $region65: #{tpu_custom_call.1} parent=63 // pred_check
          %p524 = pneg %p178
        $region66: #{tpu_custom_call.1} parent=63 // pred_check_branch
          %526 = sbr.rel (%p524) target = $region68
        $region67: #{tpu_custom_call.1} parent=63 // pred_region
          %s527 = sand.u32 %s163, 1
          %s528 = scalar_lea.sflag [#allocation4], %s527
          %s529 = sand.u32 %s163, 1
          %s530 = smul.addr %s529, 8
          %s531 = scalar_lea.vmem [#allocation10], %s530
          %533 = dma.done %s528, 128
        $region68: #{tpu_custom_call.1} parent=63 // pred_fallthru
          _
        // Predicated region
        $region69: #{tpu_custom_call.1} parent=63 // pred_check
          %p534 = pneg %p206
        $region70: #{tpu_custom_call.1} parent=63 // pred_check_branch
          %536 = sbr.rel (%p534) target = $region72
        $region71: #{tpu_custom_call.1} parent=63 // pred_region
          %s537 = sand.u32 %s191, 1
          %s538 = scalar_lea.sflag [#allocation12], %s537
          %s539 = sand.u32 %s191, 1
          %s540 = smul.addr %s539, 8
          %s541 = scalar_lea.vmem [#allocation11], %s540
          %543 = dma.done %s538, 128
        $region72: #{tpu_custom_call.1} parent=63 // pred_fallthru
          _
      $region64: #{tpu_custom_call.1} parent=5 // pred_fallthru
        _
    $region6: #{tpu_custom_call.1} parent=1 // loop_footer
      %s31 = sadd.s32 1, %s27
    $region7: #{tpu_custom_call.1} parent=1 // loop_footer_branch
      %26 = sbr.rel target = $region3
    $region8: #{tpu_custom_call.1} parent=1 // loop_exit
      _
    %544 = vsyncpa [#allocation3], 1
    %s545 = scalar_lea.sflag [#allocation3], 1
    %546 = vsyncpa %s545, 1
    %547 = vsyncpa [#allocation6], 1
    %s548 = scalar_lea.sflag [#allocation6], 1
    %549 = vsyncpa %s548, 1
    %550 = vsyncpa [#allocation9], 1
    %s551 = scalar_lea.sflag [#allocation9], 1
    %552 = vsyncpa %s551, 1
    %553 = vsyncpa [#allocation4], 1
    %s554 = scalar_lea.sflag [#allocation4], 1
    %555 = vsyncpa %s554, 1
    %556 = vsyncpa [#allocation12], 1
    %s557 = scalar_lea.sflag [#allocation12], 1
    %558 = vsyncpa %s557, 1

</llo_original>
